<compile_context>
chip_gen: v7x
topology: tpu7x:2x2x1
jax: 0.10.0
libtpu: 0.0.40
codegen_flags: <defaults>
</compile_context>

<pallas_src>
import functools

import jax
import jax.numpy as jnp
import numpy as np
from jax.experimental import pallas as pl
from jax.experimental.pallas import tpu as pltpu


def _round_up(x, m):
    return ((x + m - 1) // m) * m


def _choose_tiles(N, P, C):
    """Pick (TN, TP): TN images and TP priors (lane axis) per grid step."""
    TN = min(8, N)
    Ppad128 = _round_up(P, 128)
    # Bytes resident per (image, prior) in one block:
    #   conf bf16 (2C) + 2x loc bf16 (16) + labels i32 (4) + 2x f32 outputs (8).
    per_prior = 2 * C + 16 + 4 + 8
    # Keep one buffer set <= ~4 MiB so x2 double-buffering stays well below the default
    # scoped-VMEM limit on every generation (v7x: 64 MiB physical / 32 MiB scoped).
    budget = 4 * 1024 * 1024
    tp_cap = max(128, (budget // (TN * per_prior)) // 128 * 128)
    TP = min(2048, tp_cap, Ppad128)
    return TN, TP


# ----------------------------------------------------------------------------- kernel
def _per_position_kernel(conf_ref, locp_ref, loco_ref, label_ref, ce_ref, sl1_ref):
    # bf16 inputs, f32 compute.
    logits = conf_ref[...].astype(jnp.float32)              # (TN, C, TP)
    labels = label_ref[...]                                  # (TN, 1, TP) int32

    # log-softmax pieces; classes live on the sublane axis -> cheap sublane reductions,
    # priors stay lane-dense.
    m = jnp.max(logits, axis=1, keepdims=True)               # (TN, 1, TP)
    e = jnp.exp(logits - m)                                   # (TN, C, TP)
    s = jnp.sum(e, axis=1, keepdims=True)                     # (TN, 1, TP)
    lse = m + jnp.log(s)                                      # (TN, 1, TP)

    # cross-entropy per prior: logsumexp - logits[label] (gather via iota compare).
    cls = jax.lax.broadcasted_iota(jnp.int32, logits.shape, 1)
    picked = jnp.sum(jnp.where(cls == labels, logits, 0.0), axis=1, keepdims=True)
    ce_ref[...] = lse - picked                                # (TN, 1, TP)

    # smooth-L1 (beta = 1) over the 4 box coords, masked by the positive flag.
    posf = (labels > 0).astype(jnp.float32)                   # (TN, 1, TP)
    d = locp_ref[...].astype(jnp.float32) - loco_ref[...].astype(jnp.float32)
    ad = jnp.abs(d)
    per_elem = jnp.where(ad < 1.0, 0.5 * d * d, ad - 0.5)     # (TN, 4, TP)
    sl1_ref[...] = jnp.sum(per_elem, axis=1, keepdims=True) * posf


def _per_position(conf_pred, loc_pred, loc_oracle, labels):
    """conf (N,P,C) f32, loc (N,P,4) f32, labels (N,P) int32 ->
       ce, sl1_masked  each (N, P) float32."""
    N, P, C = conf_pred.shape
    TN, TP = _choose_tiles(N, P, C)
    Npad = _round_up(N, TN)
    Ppad = _round_up(P, TP)

    # Wrapper-side layout plumbing: prior axis -> lanes.  Cast to bf16 in the same copy
    # (halves the pre-kernel writeback and the kernel's dominant HBM read).
    conf_t = jnp.transpose(conf_pred.astype(jnp.bfloat16), (0, 2, 1))    # (N, C, P)
    locp_t = jnp.transpose(loc_pred.astype(jnp.bfloat16), (0, 2, 1))     # (N, 4, P)
    loco_t = jnp.transpose(loc_oracle.astype(jnp.bfloat16), (0, 2, 1))   # (N, 4, P)
    labels3 = labels.astype(jnp.int32)[:, None, :]                       # (N, 1, P)

    if (Npad, Ppad) != (N, P):
        pad3 = ((0, Npad - N), (0, 0), (0, Ppad - P))
        conf_t = jnp.pad(conf_t, pad3)
        locp_t = jnp.pad(locp_t, pad3)
        loco_t = jnp.pad(loco_t, pad3)
        labels3 = jnp.pad(labels3, pad3)

    lane_spec = pl.BlockSpec((TN, 1, TP), lambda n, p: (n, 0, p))
    outs = pl.pallas_call(
        _per_position_kernel,
        out_shape=[jax.ShapeDtypeStruct((Npad, 1, Ppad), jnp.float32)] * 2,
        grid=(Npad // TN, Ppad // TP),
        in_specs=[
            pl.BlockSpec((TN, C, TP), lambda n, p: (n, 0, p)),
            pl.BlockSpec((TN, 4, TP), lambda n, p: (n, 0, p)),
            pl.BlockSpec((TN, 4, TP), lambda n, p: (n, 0, p)),
            lane_spec,
        ],
        out_specs=[lane_spec, lane_spec],
        compiler_params=pltpu.CompilerParams(
            dimension_semantics=("parallel", "parallel")),
    )(conf_t, locp_t, loco_t, labels3)

    ce = outs[0][:N, 0, :P]
    sl1m = outs[1][:N, 0, :P]
    return ce, sl1m


# ----------------------------------------------------------------------------- loss
@functools.partial(jax.jit, static_argnames=("neg_pos_ratio",))
def _multibox_loss(conf_pred, loc_pred, conf_oracle, loc_oracle, *, neg_pos_ratio):
    labels = conf_oracle.astype(jnp.int32)
    ce, sl1m = _per_position(conf_pred, loc_pred, loc_oracle, labels)

    pos = labels > 0                                           # (N, P) bool
    posf = pos.astype(jnp.float32)
    num_pos = jnp.sum(posf)                                    # traced scalar, no host sync
    num_neg = jnp.floor(jnp.float32(neg_pos_ratio) * num_pos)  # matches int() truncation

    # hard_negative_mining: the reference score is sum(softmax)==1.0 for every negative
    # and 0.0 for positives, so a stable descending sort ranks negatives in index order.
    # Equivalent selection without any sort: per-row rank among negatives via cumsum.
    neg = jnp.logical_not(pos)
    rank_among_neg = jnp.cumsum(neg.astype(jnp.int32), axis=-1) - 1
    neg_sel = jnp.logical_and(neg, rank_among_neg.astype(jnp.float32) < num_neg)
    selected = jnp.logical_or(pos, neg_sel)

    conf_loss = jnp.sum(jnp.where(selected, ce, 0.0))
    loc_loss = jnp.sum(sl1m)
    loss = (conf_loss + loc_loss) / jnp.maximum(num_pos, 1.0)

    # Reference early-exits, expressed data-dependently (no retrace per call):
    # TODO(synk): reference `return torch.Tensor[0]` for num_pos==0 is itself broken; return 0.0
    # (it is shadowed by the all-background -1 branch below, matching the original control flow).
    loss = jnp.where(num_pos > 0.0, loss, jnp.float32(0.0))
    loss = jnp.where(jnp.any(conf_oracle != 0), loss, jnp.float32(-1.0))
    return loss


class MultiboxLoss:
    """JAX/Pallas port of the PyTorch MultiboxLoss module (forward pass only)."""

    def __init__(self, iou_threshold=0.5, neg_pos_ratio=3.0):
        self.iou_threshold = iou_threshold      # unused in forward (kept for parity)
        self.neg_pos_ratio = float(neg_pos_ratio)

    def __call__(self, confidence_predictions, location_predictions,
                 confidence_oracles, location_oracles):
        return _multibox_loss(confidence_predictions, location_predictions,
                              confidence_oracles, location_oracles,
                              neg_pos_ratio=self.neg_pos_ratio)


# ----------------------------------------------------------------------------- demo
if __name__ == "__main__":
    key = jax.random.PRNGKey(0)
    k1, k2, k3, k4, k5 = jax.random.split(key, 5)

    N, H, W, NUM_PRIOR, C = 2, 4, 4, 8, 8
    P = H * W * NUM_PRIOR  # 128 priors per image

    conf_pred = jax.random.normal(k1, (N, P, C), dtype=jnp.float32)
    loc_pred = jax.random.normal(k2, (N, P, 4), dtype=jnp.float32)
    loc_oracle = jax.random.normal(k3, (N, P, 4), dtype=jnp.float32)
    raw_labels = jax.random.randint(k4, (N, P), 1, C)
    is_pos = jax.random.uniform(k5, (N, P)) < 0.05   # sparse positives -> mining cutoff matters
    conf_oracle = jnp.where(is_pos, raw_labels, 0).astype(jnp.int32)
    conf_oracle = conf_oracle.at[0, 0].set(1)        # guarantee at least one positive

    loss_fn = MultiboxLoss(iou_threshold=0.5, neg_pos_ratio=3.0)
    loss = jax.block_until_ready(loss_fn(conf_pred, loc_pred, conf_oracle, loc_oracle))

    # --- per-position Pallas outputs vs pure-JAX reference (on the same bf16-rounded inputs) ---
    conf_b = conf_pred.astype(jnp.bfloat16).astype(jnp.float32)
    locp_b = loc_pred.astype(jnp.bfloat16).astype(jnp.float32)
    loco_b = loc_oracle.astype(jnp.bfloat16).astype(jnp.float32)

    ce_k, sl1m_k = jax.jit(_per_position)(conf_pred, loc_pred, loc_oracle, conf_oracle)

    pos_ref = conf_oracle > 0
    lse = jax.scipy.special.logsumexp(conf_b, axis=-1)
    picked = jnp.take_along_axis(conf_b, conf_oracle[..., None], axis=-1)[..., 0]
    ce_ref = lse - picked
    d = locp_b - loco_b
    ad = jnp.abs(d)
    sl1_ref = jnp.sum(jnp.where(ad < 1.0, 0.5 * d * d, ad - 0.5), axis=-1)
    sl1m_ref = jnp.where(pos_ref, sl1_ref, 0.0)

    np.testing.assert_allclose(np.asarray(ce_k), np.asarray(ce_ref), rtol=2e-5, atol=2e-5)
    np.testing.assert_allclose(np.asarray(sl1m_k), np.asarray(sl1m_ref), rtol=2e-5, atol=2e-5)

    # --- end-to-end check: cumsum-rank selection == stable double-argsort on the binary score ---
    num_pos = int(jnp.sum(pos_ref))
    num_neg = int(3.0 * num_pos)
    score_bin = jnp.where(pos_ref, 0.0, 1.0)
    orders = jnp.argsort(jnp.argsort(-score_bin, axis=-1), axis=-1)
    selected_ref = jnp.logical_or(pos_ref, orders < num_neg)
    loss_ref = (jnp.sum(jnp.where(selected_ref, ce_ref, 0.0)) + jnp.sum(sl1m_ref)) / num_pos
    np.testing.assert_allclose(float(loss), float(loss_ref), rtol=2e-5, atol=2e-5)
    assert np.isfinite(float(loss))

    # --- padded-shape path (N, P not multiples of the tile sizes) ---
    k6, k7, k8, k9 = jax.random.split(jax.random.PRNGKey(1), 4)
    N2, P2, C2 = 3, 200, 6
    conf2 = jax.random.normal(k6, (N2, P2, C2), dtype=jnp.float32)
    locp2 = jax.random.normal(k7, (N2, P2, 4), dtype=jnp.float32)
    loco2 = jax.random.normal(k8, (N2, P2, 4), dtype=jnp.float32)
    lab2 = jax.random.randint(k9, (N2, P2), 0, C2).astype(jnp.int32)

    ce2_k, sl2_k = jax.jit(_per_position)(conf2, locp2, loco2, lab2)
    conf2_b = conf2.astype(jnp.bfloat16).astype(jnp.float32)
    locp2_b = locp2.astype(jnp.bfloat16).astype(jnp.float32)
    loco2_b = loco2.astype(jnp.bfloat16).astype(jnp.float32)
    ce2_ref = (jax.scipy.special.logsumexp(conf2_b, axis=-1)
               - jnp.take_along_axis(conf2_b, lab2[..., None], axis=-1)[..., 0])
    d2 = locp2_b - loco2_b
    ad2 = jnp.abs(d2)
    sl2_ref = jnp.where(lab2 > 0,
                        jnp.sum(jnp.where(ad2 < 1.0, 0.5 * d2 * d2, ad2 - 0.5), axis=-1),
                        0.0)
    np.testing.assert_allclose(np.asarray(ce2_k), np.asarray(ce2_ref), rtol=2e-5, atol=2e-5)
    np.testing.assert_allclose(np.asarray(sl2_k), np.asarray(sl2_ref), rtol=2e-5, atol=2e-5)

    # --- early-exit path: no non-background oracle -> -1 (same compiled program) ---
    loss_empty = jax.block_until_ready(
        loss_fn(conf_pred, loc_pred, jnp.zeros_like(conf_oracle), loc_oracle))
    assert float(loss_empty) == -1.0

    print("KERNEL_OK")
</pallas_src>

<mosaic_0001>
module attributes {stable_mosaic.version = 11 : i64} {
  func.func @_per_position_kernel(%arg0: i32, %arg1: i32, %arg2: memref<2x8x128xbf16, #tpu.memory_space<vmem>>, %arg3: memref<2x4x128xbf16, #tpu.memory_space<vmem>>, %arg4: memref<2x4x128xbf16, #tpu.memory_space<vmem>>, %arg5: memref<2x1x128xi32, #tpu.memory_space<vmem>>, %arg6: memref<2x1x128xf32, #tpu.memory_space<vmem>>, %arg7: memref<2x1x128xf32, #tpu.memory_space<vmem>>) attributes {dimension_semantics = [#tpu.dimension_semantics<parallel>, #tpu.dimension_semantics<parallel>], iteration_bounds = array<i64: 1, 1>, scalar_prefetch = 0 : i64, scratch_operands = 0 : i64, tpu.core_type = #tpu.core_type<tc>, window_params = [{transform_indices = @transform_0, window_bounds = array<i64: 2, 8, 128>}, {transform_indices = @transform_1, window_bounds = array<i64: 2, 4, 128>}, {transform_indices = @transform_2, window_bounds = array<i64: 2, 4, 128>}, {transform_indices = @transform_3, window_bounds = array<i64: 2, 1, 128>}, {transform_indices = @transform_4, window_bounds = array<i64: 2, 1, 128>}, {transform_indices = @transform_5, window_bounds = array<i64: 2, 1, 128>}]} {
    %c0 = arith.constant 0 : index
    %c0_0 = arith.constant 0 : index
    %c0_1 = arith.constant 0 : index
    %0 = vector.load %arg2[%c0, %c0_0, %c0_1] : memref<2x8x128xbf16, #tpu.memory_space<vmem>>, vector<2x8x128xbf16>
    %1 = arith.extf %0 : vector<2x8x128xbf16> to vector<2x8x128xf32>
    %c0_2 = arith.constant 0 : index
    %c0_3 = arith.constant 0 : index
    %c0_4 = arith.constant 0 : index
    %2 = vector.load %arg5[%c0_2, %c0_3, %c0_4] : memref<2x1x128xi32, #tpu.memory_space<vmem>>, vector<2x1x128xi32>
    %cst = arith.constant dense<0xFF800000> : vector<2x128xf32>
    %3 = vector.multi_reduction <maximumf>, %1, %cst [1] : vector<2x8x128xf32> to vector<2x128xf32>
    %4 = vector.shape_cast %3 : vector<2x128xf32> to vector<2x1x128xf32>
    %5 = vector.broadcast %4 : vector<2x1x128xf32> to vector<2x8x128xf32>
    %6 = arith.subf %1, %5 : vector<2x8x128xf32>
    %7 = math.exp %6 : vector<2x8x128xf32>
    %cst_5 = arith.constant dense<0.000000e+00> : vector<2x128xf32>
    %8 = vector.multi_reduction <add>, %7, %cst_5 [1] : vector<2x8x128xf32> to vector<2x128xf32>
    %9 = vector.shape_cast %8 : vector<2x128xf32> to vector<2x1x128xf32>
    %10 = math.log %9 : vector<2x1x128xf32>
    %11 = arith.addf %4, %10 : vector<2x1x128xf32>
    %12 = tpu.iota {dimensions = array<i32: 1>} : vector<2x8x128xi32>
    %13 = vector.broadcast %2 : vector<2x1x128xi32> to vector<2x8x128xi32>
    %14 = arith.cmpi eq, %12, %13 : vector<2x8x128xi32>
    %cst_6 = arith.constant 0.000000e+00 : f32
    %15 = vector.broadcast %cst_6 : f32 to vector<2x8x128xf32>
    %16 = arith.select %14, %1, %15 : vector<2x8x128xi1>, vector<2x8x128xf32>
    %cst_7 = arith.constant dense<0.000000e+00> : vector<2x128xf32>
    %17 = vector.multi_reduction <add>, %16, %cst_7 [1] : vector<2x8x128xf32> to vector<2x128xf32>
    %18 = vector.shape_cast %17 : vector<2x128xf32> to vector<2x1x128xf32>
    %19 = arith.subf %11, %18 : vector<2x1x128xf32>
    %c0_8 = arith.constant 0 : index
    %c0_9 = arith.constant 0 : index
    %c0_10 = arith.constant 0 : index
    %20 = vector.load %arg6[%c0_8, %c0_9, %c0_10] : memref<2x1x128xf32, #tpu.memory_space<vmem>>, vector<2x1x128xf32>
    tpu.vector_store %arg6[%c0_8, %c0_9, %c0_10], %19 {strides = array<i32>} : memref<2x1x128xf32, #tpu.memory_space<vmem>>, vector<2x1x128xf32>,
    %c0_i32 = arith.constant 0 : i32
    %21 = vector.broadcast %c0_i32 : i32 to vector<2x1x128xi32>
    %22 = arith.cmpi sgt, %2, %21 : vector<2x1x128xi32>
    %23 = arith.extui %22 : vector<2x1x128xi1> to vector<2x1x128xi32>
    %24 = arith.sitofp %23 : vector<2x1x128xi32> to vector<2x1x128xf32>
    %c0_11 = arith.constant 0 : index
    %c0_12 = arith.constant 0 : index
    %c0_13 = arith.constant 0 : index
    %25 = vector.load %arg3[%c0_11, %c0_12, %c0_13] : memref<2x4x128xbf16, #tpu.memory_space<vmem>>, vector<2x4x128xbf16>
    %26 = arith.extf %25 : vector<2x4x128xbf16> to vector<2x4x128xf32>
    %c0_14 = arith.constant 0 : index
    %c0_15 = arith.constant 0 : index
    %c0_16 = arith.constant 0 : index
    %27 = vector.load %arg4[%c0_14, %c0_15, %c0_16] : memref<2x4x128xbf16, #tpu.memory_space<vmem>>, vector<2x4x128xbf16>
    %28 = arith.extf %27 : vector<2x4x128xbf16> to vector<2x4x128xf32>
    %29 = arith.subf %26, %28 : vector<2x4x128xf32>
    %30 = math.absf %29 : vector<2x4x128xf32>
    %cst_17 = arith.constant 1.000000e+00 : f32
    %31 = vector.broadcast %cst_17 : f32 to vector<2x4x128xf32>
    %32 = arith.cmpf olt, %30, %31 : vector<2x4x128xf32>
    %cst_18 = arith.constant 5.000000e-01 : f32
    %33 = vector.broadcast %cst_18 : f32 to vector<2x4x128xf32>
    %34 = arith.mulf %33, %29 : vector<2x4x128xf32>
    %35 = arith.mulf %34, %29 : vector<2x4x128xf32>
    %cst_19 = arith.constant 5.000000e-01 : f32
    %36 = vector.broadcast %cst_19 : f32 to vector<2x4x128xf32>
    %37 = arith.subf %30, %36 : vector<2x4x128xf32>
    %38 = arith.select %32, %35, %37 : vector<2x4x128xi1>, vector<2x4x128xf32>
    %cst_20 = arith.constant dense<0.000000e+00> : vector<2x128xf32>
    %39 = vector.multi_reduction <add>, %38, %cst_20 [1] : vector<2x4x128xf32> to vector<2x128xf32>
    %40 = vector.shape_cast %39 : vector<2x128xf32> to vector<2x1x128xf32>
    %41 = arith.mulf %40, %24 : vector<2x1x128xf32>
    %c0_21 = arith.constant 0 : index
    %c0_22 = arith.constant 0 : index
    %c0_23 = arith.constant 0 : index
    %42 = vector.load %arg7[%c0_21, %c0_22, %c0_23] : memref<2x1x128xf32, #tpu.memory_space<vmem>>, vector<2x1x128xf32>
    tpu.vector_store %arg7[%c0_21, %c0_22, %c0_23], %41 {strides = array<i32>} : memref<2x1x128xf32, #tpu.memory_space<vmem>>, vector<2x1x128xf32>,
    return
  }
  func.func @transform_0(%arg0: i32, %arg1: i32) -> (i32, i32, i32) {
    %c0_i32 = arith.constant 0 : i32
    %c0_i32_0 = arith.constant 0 : i32
    return %arg0, %c0_i32, %arg1 : i32, i32, i32
  }
  func.func @transform_1(%arg0: i32, %arg1: i32) -> (i32, i32, i32) {
    %c0_i32 = arith.constant 0 : i32
    %c0_i32_0 = arith.constant 0 : i32
    return %arg0, %c0_i32, %arg1 : i32, i32, i32
  }
  func.func @transform_2(%arg0: i32, %arg1: i32) -> (i32, i32, i32) {
    %c0_i32 = arith.constant 0 : i32
    %c0_i32_0 = arith.constant 0 : i32
    return %arg0, %c0_i32, %arg1 : i32, i32, i32
  }
  func.func @transform_3(%arg0: i32, %arg1: i32) -> (i32, i32, i32) {
    %c0_i32 = arith.constant 0 : i32
    %c0_i32_0 = arith.constant 0 : i32
    return %arg0, %c0_i32, %arg1 : i32, i32, i32
  }
  func.func @transform_4(%arg0: i32, %arg1: i32) -> (i32, i32, i32) {
    %c0_i32 = arith.constant 0 : i32
    %c0_i32_0 = arith.constant 0 : i32
    return %arg0, %c0_i32, %arg1 : i32, i32, i32
  }
  func.func @transform_5(%arg0: i32, %arg1: i32) -> (i32, i32, i32) {
    %c0_i32 = arith.constant 0 : i32
    %c0_i32_0 = arith.constant 0 : i32
    return %arg0, %c0_i32, %arg1 : i32, i32, i32
  }
}

</mosaic_0001>

<llo_original>
// kernel: _multibox_loss.1
$region0: #{_multibox_loss.1}
  #allocation0 [shape = 'u32[]', space=smem, size = 0x4, offset = 0x4, fixed_abs, tag = 'smem constant byte address 0x4 - core index']
  #allocation1 [shape = 'u32[144,128]{1,0:T(1,128)}', space=vmem, size = 0x12000, scoped, tag = 'internal scratch']
  %s0 = inlined_call_operand.vmem [shape: bf16[2,8,128], index: 0, kind: input, shape index: {}]
  %s1 = inlined_call_operand.vmem [shape: bf16[2,4,128], index: 1, kind: input, shape index: {}]
  %s2 = inlined_call_operand.vmem [shape: bf16[2,4,128], index: 2, kind: input, shape index: {}]
  %s3 = inlined_call_operand.vmem [shape: s32[2,1,128], index: 3, kind: input, shape index: {}]
  %s4 = inlined_call_operand.vmem [shape: f32[2,1,128], index: 4, kind: output, shape index: {0}]
  %s5 = inlined_call_operand.vmem [shape: f32[2,1,128], index: 5, kind: output, shape index: {1}]
  %6 = xla_tuple %s4, %s5
  %s7 = sld [smem:[#allocation0]]
  $region34: #{_multibox_loss.1} parent=0
    _
  %s9 = ssub.s32 1, %s7
  %s10 = scalar_select 0, %s9, %s7
  // Predicated region
  $region2: #{_multibox_loss.1} parent=0 // pred_check
    _
  $region3: #{_multibox_loss.1} parent=0 // pred_check_branch
    %12 = sbr.rel (0) target = $region5
  $region4: #{_multibox_loss.1} parent=0 // pred_region
    _
  $region5: #{_multibox_loss.1} parent=0 // pred_fallthru
    _
  // Predicated region
  $region6: #{_multibox_loss.1} parent=0 // pred_check
    _
  $region7: #{_multibox_loss.1} parent=0 // pred_check_branch
    %14 = sbr.rel (0) target = $region9
  $region8: #{_multibox_loss.1} parent=0 // pred_region
    _
  $region9: #{_multibox_loss.1} parent=0 // pred_fallthru
    _
  // Predicated region
  $region10: #{_multibox_loss.1} parent=0 // pred_check
    _
  $region11: #{_multibox_loss.1} parent=0 // pred_check_branch
    %16 = sbr.rel (0) target = $region13
  $region12: #{_multibox_loss.1} parent=0 // pred_region
    _
  $region13: #{_multibox_loss.1} parent=0 // pred_fallthru
    _
  // Predicated region
  $region14: #{_multibox_loss.1} parent=0 // pred_check
    _
  $region15: #{_multibox_loss.1} parent=0 // pred_check_branch
    %18 = sbr.rel (0) target = $region17
  $region16: #{_multibox_loss.1} parent=0 // pred_region
    _
  $region17: #{_multibox_loss.1} parent=0 // pred_fallthru
    _
  %v19 = vld [vmem:[%s0] sm:$0xf]
  %v20 = vld [vmem:[%s0 + $0x4] sm:$0xf]
  %v21 = vunpack.c.l.bf16 %v19
  %v22 = vunpack.c.l.bf16 %v20
  %v23 = vld [vmem:[%s3] sm:$0x1]
  %v24 = vld [vmem:[%s3 + $0x1] sm:$0x1]
  %v25 = vrot.slane %v21, 4
  %v26 = vmax.f32 %v21, %v25
  %v27 = vrot.slane %v26, 2
  %v28 = vmax.f32 %v26, %v27
  %v29 = vrot.slane %v28, 1
  %v30 = vmax.f32 %v28, %v29
  %v31 = vrot.slane %v22, 4
  %v32 = vmax.f32 %v22, %v31
  %v33 = vrot.slane %v32, 2
  %v34 = vmax.f32 %v32, %v33
  %v35 = vrot.slane %v34, 1
  %v36 = vmax.f32 %v34, %v35
  %v37 = vsub.f32 %v21, %v30
  %v38 = vsub.f32 %v22, %v36
  %v39 = vmul.f32 %v37, 1.442695
  %v40 = vpow.pop %v39
  %v41 = vmul.f32 %v38, 1.442695
  %v42 = vpow.pop %v41
  %v43 = vrot.slane %v40, 4
  %v44 = vadd.f32 %v40, %v43
  %v45 = vrot.slane %v44, 2
  %v46 = vadd.f32 %v44, %v45
  %v47 = vrot.slane %v46, 1
  %v48 = vadd.f32 %v46, %v47
  %v49 = vrot.slane %v42, 4
  %v50 = vadd.f32 %v42, %v49
  %v51 = vrot.slane %v50, 2
  %v52 = vadd.f32 %v50, %v51
  %v53 = vrot.slane %v52, 1
  %v54 = vadd.f32 %v52, %v53
  %v55 = vlog2.pop %v48
  %v56 = vmul.f32 %v55, 0.6931472
  %v57 = vlog2.pop %v54
  %v58 = vmul.f32 %v57, 0.6931472
  %v59 = vadd.f32 %v30, %v56
  %v60 = vadd.f32 %v36, %v58
  %v61 = vlaneseq
  %v62 = vshrl.u32 %v61, 7
  %v63 = vlaneseq
  %v64 = vshrl.u32 %v63, 7
  %v65 = vsub.s32 0, %v64
  %v66 = vrot.slane %v23, %v65
  %v67 = vlaneseq
  %v68 = vshrl.u32 %v67, 7
  %v69 = vsub.s32 0, %v68
  %v70 = vrot.slane %v24, %v69
  %vm71 = vcmp.eq.s32.totalorder %v62, %v66
  %vm72 = vcmp.eq.s32.totalorder %v62, %v70
  %v73 = vsel %vm71, %v21, 0.0
  %v74 = vsel %vm72, %v22, 0.0
  %v75 = vrot.slane %v73, 4
  %v76 = vadd.f32 %v73, %v75
  %v77 = vrot.slane %v76, 2
  %v78 = vadd.f32 %v76, %v77
  %v79 = vrot.slane %v78, 1
  %v80 = vadd.f32 %v78, %v79
  %v81 = vrot.slane %v74, 4
  %v82 = vadd.f32 %v74, %v81
  %v83 = vrot.slane %v82, 2
  %v84 = vadd.f32 %v82, %v83
  %v85 = vrot.slane %v84, 1
  %v86 = vadd.f32 %v84, %v85
  %v87 = vsub.f32 %v59, %v80
  %v88 = vsub.f32 %v60, %v86
  %89 = vst [vmem:[%s4] sm:$0x1] %v87
  %90 = vst [vmem:[%s4 + $0x1] sm:$0x1] %v88
  %vm91 = vcmp.gt.s32.totalorder %v23, 0
  %vm92 = vcmp.gt.s32.totalorder %v24, 0
  %v93 = vsel %vm91, 1, 0
  %v94 = vsel %vm92, 1, 0
  %v95 = vcvt.s32.f32 %v93
  %v96 = vcvt.s32.f32 %v94
  %v97 = vld [vmem:[%s1] sm:$0x3]
  %v98 = vld [vmem:[%s1 + $0x2] sm:$0x3]
  %v99 = vunpack.c.l.bf16 %v97
  %v100 = vunpack.c.l.bf16 %v98
  %v101 = vld [vmem:[%s2] sm:$0x3]
  %v102 = vld [vmem:[%s2 + $0x2] sm:$0x3]
  %v103 = vunpack.c.l.bf16 %v101
  %v104 = vunpack.c.l.bf16 %v102
  %v105 = vsub.f32 %v99, %v103
  %v106 = vsub.f32 %v100, %v104
  %v107 = vand.u32 2147483647, %v105
  %v108 = vand.u32 2147483647, %v106
  %vm109 = vcmp.lt.f32.partialorder %v107, 1.0
  %vm110 = vcmp.lt.f32.partialorder %v108, 1.0
  %v111 = vmul.f32 %v105, 0.5
  %v112 = vmul.f32 %v106, 0.5
  %v113 = vmul.f32 %v111, %v105
  %v114 = vmul.f32 %v112, %v106
  %v115 = vsub.f32 %v107, 0.5
  %v116 = vsub.f32 %v108, 0.5
  %v117 = vsel %vm109, %v113, %v115
  %v118 = vsel %vm110, %v114, %v116
  %vm119 = vcmask 1043456
  %v120 = vsel %vm119, %v117, 0.0
  %v121 = vrot.slane %v120, 4
  %v122 = vadd.f32 %v120, %v121
  %v123 = vrot.slane %v122, 2
  %v124 = vadd.f32 %v122, %v123
  %v125 = vrot.slane %v124, 1
  %v126 = vadd.f32 %v124, %v125
  %v127 = vsel %vm119, %v118, 0.0
  %v128 = vrot.slane %v127, 4
  %v129 = vadd.f32 %v127, %v128
  %v130 = vrot.slane %v129, 2
  %v131 = vadd.f32 %v129, %v130
  %v132 = vrot.slane %v131, 1
  %v133 = vadd.f32 %v131, %v132
  %v134 = vmul.f32 %v126, %v95
  %v135 = vmul.f32 %v133, %v96
  %136 = vst [vmem:[%s5] sm:$0x1] %v134
  %137 = vst [vmem:[%s5 + $0x1] sm:$0x1] %v135
  // Predicated region
  $region18: #{_multibox_loss.1} parent=0 // pred_check
    _
  $region19: #{_multibox_loss.1} parent=0 // pred_check_branch
    %139 = sbr.rel (0) target = $region21
  $region20: #{_multibox_loss.1} parent=0 // pred_region
    _
  $region21: #{_multibox_loss.1} parent=0 // pred_fallthru
    _
  // Predicated region
  $region22: #{_multibox_loss.1} parent=0 // pred_check
    _
  $region23: #{_multibox_loss.1} parent=0 // pred_check_branch
    %141 = sbr.rel (0) target = $region25
  $region24: #{_multibox_loss.1} parent=0 // pred_region
    _
  $region25: #{_multibox_loss.1} parent=0 // pred_fallthru
    _
  // Predicated region
  $region26: #{_multibox_loss.1} parent=0 // pred_check
    _
  $region27: #{_multibox_loss.1} parent=0 // pred_check_branch
    %143 = sbr.rel (0) target = $region29
  $region28: #{_multibox_loss.1} parent=0 // pred_region
    _
  $region29: #{_multibox_loss.1} parent=0 // pred_fallthru
    _
  // Predicated region
  $region30: #{_multibox_loss.1} parent=0 // pred_check
    _
  $region31: #{_multibox_loss.1} parent=0 // pred_check_branch
    %145 = sbr.rel (0) target = $region33
  $region32: #{_multibox_loss.1} parent=0 // pred_region
    _
  $region33: #{_multibox_loss.1} parent=0 // pred_fallthru
    _

</llo_original>
